<compile_context>
chip_gen: v5e
topology: v5e:2x2
jax: 0.10.0
libtpu: 0.0.40
codegen_flags: <defaults>
</compile_context>

<pallas_src>
from functools import partial

import jax
import jax.numpy as jnp
from jax.experimental import pallas as pl
from jax.experimental.pallas import tpu as pltpu

LN_EPS = 1e-5


def _round_up(x, m):
    return ((x + m - 1) // m) * m


# ================================ Pallas kernel =================================
def _patch_embed_kernel(p_ref, w_ref, aff_ref, o_ref, *, C, eps):
    """Fused im2col-matmul conv + bias + LayerNorm for one tile of token rows.

    p_ref   : (block_m, Kp)  im2col patches (bf16 or f32), Kp = padded kh*kw*Cin
    w_ref   : (Kp, Np)       conv weight as a matrix, output dim zero-padded to Np (lane-dense)
    aff_ref : (3, Np)        f32 [conv bias ; LN gamma ; LN beta], each zero past C
    o_ref   : (block_m, Np)  normalized tokens; lanes >= C are exactly 0
    """
    acc = jnp.dot(p_ref[...], w_ref[...], preferred_element_type=jnp.float32)
    aff = aff_ref[...]                       # (3, Np) f32, VMEM-resident across grid steps
    acc = acc + aff[0:1, :]                  # conv bias

    # LayerNorm over the first C lanes.  Lanes >= C of `acc` are exactly 0 (zero-padded
    # weight columns and bias), so full-width sums equal the valid-lane sums: no iota,
    # no compare, no where.  E[x^2] - mean^2 form -> the two XLU reductions are independent.
    inv_c = 1.0 / C
    mean = jnp.sum(acc, axis=-1, keepdims=True) * inv_c
    var = jnp.sum(acc * acc, axis=-1, keepdims=True) * inv_c - mean * mean
    var = jnp.maximum(var, 0.0)              # guard tiny negative from cancellation
    y = (acc - mean) * jax.lax.rsqrt(var + eps)
    # gamma/beta are zero past C, so padded output lanes come out exactly 0.
    o_ref[...] = (y * aff[1:2, :] + aff[2:3, :]).astype(o_ref.dtype)


# ================================ wrapper =======================================
def overlap_patch_embed(x_nchw, w, b, gamma, beta, *, stride, block_m=1024,
                        use_bf16=True, out_dtype=jnp.float32):
    """OverlapPatchEmbed.forward.

    x_nchw : (B, Cin, H, W)  (PyTorch layout)
    w      : (Cout, Cin, kh, kw) conv weight; b/gamma/beta: (Cout,)
    returns (tokens of shape (B, Ho*Wo, Cout), Ho, Wo)
    """
    B, Cin, H, W = x_nchw.shape
    Cout, _, kh, kw = w.shape
    ph, pw = kh // 2, kw // 2
    Ho = (H + 2 * ph - kh) // stride + 1
    Wo = (W + 2 * pw - kw) // stride + 1

    # bf16 operands by default: cast BEFORE im2col so the materialized patches matrix
    # (the dominant HBM traffic) is written and re-read at half width.  MXU accumulation
    # and the LN epilogue remain f32 (v5e has no bf16 VPU).
    op_dtype = jnp.bfloat16 if use_bf16 else jnp.float32

    x = jnp.transpose(x_nchw, (0, 2, 3, 1)).astype(op_dtype)      # NHWC: channels on lanes
    xp = jnp.pad(x, ((0, 0), (ph, ph), (pw, pw), (0, 0)))

    # im2col, feature order (dy, dx, cin) — matches w transposed to (kh, kw, cin, cout).
    # TODO(synk): for large images fold this tap loop into the kernel (pl.ANY + manual DMA
    # over a stride-phase decomposed input) instead of materializing the M x Kp matrix.
    cols = []
    for dy in range(kh):
        for dx in range(kw):
            cols.append(xp[:, dy:dy + stride * (Ho - 1) + 1:stride,
                              dx:dx + stride * (Wo - 1) + 1:stride, :])
    patches = jnp.concatenate(cols, axis=-1).reshape(B * Ho * Wo, kh * kw * Cin)

    M = B * Ho * Wo
    K = kh * kw * Cin
    Kp = _round_up(K, 16)              # sublane-aligned reduction dim (f32: 8, bf16: 16)
    Np = _round_up(Cout, 128)          # lane-dense output -> unmasked stores, full-width MXU

    w_mat = jnp.transpose(w, (2, 3, 1, 0)).reshape(K, Cout).astype(op_dtype)
    w_mat = jnp.pad(w_mat, ((0, Kp - K), (0, Np - Cout)))
    patches = jnp.pad(patches, ((0, 0), (0, Kp - K)))

    # bias / gamma / beta packed into one constant-index operand: (3, Np), zero past Cout.
    affine = jnp.stack([
        jnp.pad(b.astype(jnp.float32), (0, Np - Cout)),
        jnp.pad(gamma.astype(jnp.float32), (0, Np - Cout)),
        jnp.pad(beta.astype(jnp.float32), (0, Np - Cout)),
    ], axis=0)

    # Cap block_m at ceil(M/2) (rounded to 8) so grid_m >= 2 and the "parallel" axis can
    # shard across both v7x TensorCores even for small M.  Tail tile (if M % block_m != 0)
    # computes LN on whatever the pipeline loads past the end of `patches`; the masked store
    # keeps the visible output correct (do not alias / read the padded rows).
    block_m = max(8, min(block_m, _round_up(-(-M // 2), 8)))
    grid_m = pl.cdiv(M, block_m)

    out = pl.pallas_call(
        partial(_patch_embed_kernel, C=Cout, eps=LN_EPS),
        out_shape=jax.ShapeDtypeStruct((M, Np), out_dtype),
        grid=(grid_m,),
        in_specs=[
            # Streaming operand.  If DMA latency is still exposed on v6e after the larger
            # block_m, add pipeline_mode=pl.Buffered(3) here (and only here).
            pl.BlockSpec((block_m, Kp), lambda i: (i, 0)),
            pl.BlockSpec((Kp, Np), lambda i: (0, 0)),   # constant index -> fetched once
            pl.BlockSpec((3, Np), lambda i: (0, 0)),    # constant index -> fetched once
        ],
        out_specs=pl.BlockSpec((block_m, Np), lambda i: (i, 0)),
        compiler_params=pltpu.CompilerParams(
            dimension_semantics=("parallel",),
            vmem_limit_bytes=32 * 1024 * 1024,
        ),
    )(patches, w_mat, affine)

    out = out.reshape(B, Ho * Wo, Np)                   # free: contiguous reshape
    tokens = out if Cout == Np else out[..., :Cout]     # slice only when Cout % 128 != 0
    return tokens, Ho, Wo


# ============================ pure-JAX reference =================================
def _reference(x_nchw, w, b, gamma, beta, stride):
    kh, kw = int(w.shape[2]), int(w.shape[3])
    y = jax.lax.conv_general_dilated(
        x_nchw, w, window_strides=(stride, stride),
        padding=((kh // 2, kh // 2), (kw // 2, kw // 2)),
        dimension_numbers=("NCHW", "OIHW", "NCHW"),
        precision=jax.lax.Precision.HIGHEST)
    y = y + b.reshape(1, -1, 1, 1)
    B, C, Ho, Wo = y.shape
    t = jnp.transpose(y.reshape(B, C, Ho * Wo), (0, 2, 1))
    mu = jnp.mean(t, axis=-1, keepdims=True)
    var = jnp.mean((t - mu) ** 2, axis=-1, keepdims=True)
    t = (t - mu) * jax.lax.rsqrt(var + LN_EPS) * gamma + beta
    return t, Ho, Wo


# ==================================== main =======================================
if __name__ == "__main__":
    keys = iter(jax.random.split(jax.random.PRNGKey(0), 32))

    # ---- Stage-1 style OverlapPatchEmbed: 7x7, stride 4, 3 -> 64 channels, 32x32 input.
    B, Cin, H, W = 2, 3, 32, 32
    Cout, ksz, stride = 64, 7, 4
    x = jax.random.normal(next(keys), (B, Cin, H, W), jnp.float32)
    w = 0.1 * jax.random.normal(next(keys), (Cout, Cin, ksz, ksz), jnp.float32)
    b = 0.02 * jax.random.normal(next(keys), (Cout,), jnp.float32)
    g = 1.0 + 0.05 * jax.random.normal(next(keys), (Cout,), jnp.float32)
    bt = 0.05 * jax.random.normal(next(keys), (Cout,), jnp.float32)

    ref, Hr, Wr = _reference(x, w, b, g, bt, stride)

    # bf16-operand default path (f32 accumulation + f32 LN epilogue).
    fwd_bf16 = jax.jit(partial(overlap_patch_embed, stride=stride))
    tokens, Ho, Wo = fwd_bf16(x, w, b, g, bt)
    tokens = jax.block_until_ready(tokens)
    Ho, Wo = int(Ho), int(Wo)
    assert tokens.shape == (B, Ho * Wo, Cout), tokens.shape
    assert (Ho, Wo) == (int(Hr), int(Wr)) == (H // stride, W // stride)
    assert bool(jnp.all(jnp.isfinite(tokens)))
    assert bool(jnp.allclose(tokens, ref, atol=5e-2, rtol=5e-2))

    # f32-operand path, tight tolerance.
    fwd_f32 = jax.jit(partial(overlap_patch_embed, stride=stride, use_bf16=False))
    tok_f32, _, _ = fwd_f32(x, w, b, g, bt)
    tok_f32 = jax.block_until_ready(tok_f32)
    assert bool(jnp.allclose(tok_f32, ref, atol=2e-2, rtol=2e-2))

    # ---- Stage-2 style config: 3x3, stride 2, 64 -> 128 (lane-dense Cout; no output slice).
    B2, C2i, H2, W2, C2o = 2, 64, 8, 8, 128
    x2 = jax.random.normal(next(keys), (B2, C2i, H2, W2), jnp.float32)
    w2 = 0.05 * jax.random.normal(next(keys), (C2o, C2i, 3, 3), jnp.float32)
    b2 = 0.02 * jax.random.normal(next(keys), (C2o,), jnp.float32)
    g2 = 1.0 + 0.05 * jax.random.normal(next(keys), (C2o,), jnp.float32)
    bt2 = 0.05 * jax.random.normal(next(keys), (C2o,), jnp.float32)
    t2, H2o, W2o = jax.jit(partial(overlap_patch_embed, stride=2))(x2, w2, b2, g2, bt2)
    t2 = jax.block_until_ready(t2)
    r2, _, _ = _reference(x2, w2, b2, g2, bt2, 2)
    assert t2.shape == (B2, int(H2o) * int(W2o), C2o), t2.shape
    assert bool(jnp.allclose(t2, r2, atol=5e-2, rtol=5e-2))
    t2f, _, _ = jax.jit(partial(overlap_patch_embed, stride=2, use_bf16=False))(x2, w2, b2, g2, bt2)
    t2f = jax.block_until_ready(t2f)
    assert bool(jnp.allclose(t2f, r2, atol=2e-2, rtol=2e-2))

    # ---- Ragged-M case (M=25 not divisible by block_m): exercises the masked tail tile.
    B3, C3i, H3, W3, C3o = 1, 3, 20, 20, 32
    x3 = jax.random.normal(next(keys), (B3, C3i, H3, W3), jnp.float32)
    w3 = 0.1 * jax.random.normal(next(keys), (C3o, C3i, 7, 7), jnp.float32)
    b3 = 0.02 * jax.random.normal(next(keys), (C3o,), jnp.float32)
    g3 = 1.0 + 0.05 * jax.random.normal(next(keys), (C3o,), jnp.float32)
    bt3 = 0.05 * jax.random.normal(next(keys), (C3o,), jnp.float32)
    t3, H3o, W3o = jax.jit(partial(overlap_patch_embed, stride=4, use_bf16=False))(x3, w3, b3, g3, bt3)
    t3 = jax.block_until_ready(t3)
    r3, H3r, W3r = _reference(x3, w3, b3, g3, bt3, 4)
    assert t3.shape == (B3, int(H3o) * int(W3o), C3o), t3.shape
    assert (int(H3o), int(W3o)) == (int(H3r), int(W3r))
    assert bool(jnp.all(jnp.isfinite(t3)))
    assert bool(jnp.allclose(t3, r3, atol=2e-2, rtol=2e-2))

    print("KERNEL_OK")
</pallas_src>

<mosaic_0001>
module attributes {stable_mosaic.version = 11 : i64} {
  func.func @_patch_embed_kernel(%arg0: i32, %arg1: memref<64x160xbf16, #tpu.memory_space<vmem>>, %arg2: memref<160x128xbf16, #tpu.memory_space<vmem>>, %arg3: memref<3x128xf32, #tpu.memory_space<vmem>>, %arg4: memref<64x128xf32, #tpu.memory_space<vmem>>) attributes {dimension_semantics = [#tpu.dimension_semantics<parallel>], iteration_bounds = array<i64: 2>, scalar_prefetch = 0 : i64, scratch_operands = 0 : i64, tpu.core_type = #tpu.core_type<tc>, window_params = [{transform_indices = @transform_0, window_bounds = array<i64: 64, 160>}, {pipeline_mode = #tpu.pipeline_mode<synchronous>, transform_indices = @transform_1, window_bounds = array<i64: 160, 128>}, {pipeline_mode = #tpu.pipeline_mode<synchronous>, transform_indices = @transform_2, window_bounds = array<i64: 3, 128>}, {transform_indices = @transform_3, window_bounds = array<i64: 64, 128>}]} {
    %c0 = arith.constant 0 : index
    %c0_0 = arith.constant 0 : index
    %0 = vector.load %arg1[%c0, %c0_0] : memref<64x160xbf16, #tpu.memory_space<vmem>>, vector<64x160xbf16>
    %c0_1 = arith.constant 0 : index
    %c0_2 = arith.constant 0 : index
    %1 = vector.load %arg2[%c0_1, %c0_2] : memref<160x128xbf16, #tpu.memory_space<vmem>>, vector<160x128xbf16>
    %cst = arith.constant dense<0.000000e+00> : vector<64x128xf32>
    %2 = tpu.matmul %0, %1, %cst {dimension_numbers = #tpu.dot_dimension_numbers<[1], [0], [0], [1], [0, 0, 1, 1], [], []>} : vector<64x160xbf16>, vector<160x128xbf16>, vector<64x128xf32> -> vector<64x128xf32>
    %c0_3 = arith.constant 0 : index
    %c0_4 = arith.constant 0 : index
    %3 = vector.load %arg3[%c0_3, %c0_4] : memref<3x128xf32, #tpu.memory_space<vmem>>, vector<3x128xf32>
    %4 = vector.extract_strided_slice %3 {offsets = [0, 0], sizes = [1, 128], strides = [1, 1]} : vector<3x128xf32> to vector<1x128xf32>
    %5 = vector.broadcast %4 : vector<1x128xf32> to vector<64x128xf32>
    %6 = arith.addf %2, %5 : vector<64x128xf32>
    %cst_5 = arith.constant dense<0.000000e+00> : vector<64xf32>
    %7 = vector.multi_reduction <add>, %6, %cst_5 [1] : vector<64x128xf32> to vector<64xf32>
    %8 = vector.shape_cast %7 : vector<64xf32> to vector<64x1xf32>
    %cst_6 = arith.constant 1.562500e-02 : f32
    %9 = vector.broadcast %cst_6 : f32 to vector<64x1xf32>
    %10 = arith.mulf %8, %9 : vector<64x1xf32>
    %11 = arith.mulf %6, %6 : vector<64x128xf32>
    %cst_7 = arith.constant dense<0.000000e+00> : vector<64xf32>
    %12 = vector.multi_reduction <add>, %11, %cst_7 [1] : vector<64x128xf32> to vector<64xf32>
    %13 = vector.shape_cast %12 : vector<64xf32> to vector<64x1xf32>
    %cst_8 = arith.constant 1.562500e-02 : f32
    %14 = vector.broadcast %cst_8 : f32 to vector<64x1xf32>
    %15 = arith.mulf %13, %14 : vector<64x1xf32>
    %16 = arith.mulf %10, %10 : vector<64x1xf32>
    %17 = arith.subf %15, %16 : vector<64x1xf32>
    %cst_9 = arith.constant 0.000000e+00 : f32
    %18 = vector.broadcast %cst_9 : f32 to vector<64x1xf32>
    %19 = arith.maximumf %17, %18 : vector<64x1xf32>
    %20 = vector.broadcast %10 : vector<64x1xf32> to vector<64x128xf32>
    %21 = arith.subf %6, %20 : vector<64x128xf32>
    %cst_10 = arith.constant 9.99999974E-6 : f32
    %22 = vector.broadcast %cst_10 : f32 to vector<64x1xf32>
    %23 = arith.addf %19, %22 : vector<64x1xf32>
    %24 = math.rsqrt %23 : vector<64x1xf32>
    %25 = vector.broadcast %24 : vector<64x1xf32> to vector<64x128xf32>
    %26 = arith.mulf %21, %25 : vector<64x128xf32>
    %27 = vector.extract_strided_slice %3 {offsets = [1, 0], sizes = [1, 128], strides = [1, 1]} : vector<3x128xf32> to vector<1x128xf32>
    %28 = vector.broadcast %27 : vector<1x128xf32> to vector<64x128xf32>
    %29 = arith.mulf %26, %28 : vector<64x128xf32>
    %30 = vector.extract_strided_slice %3 {offsets = [2, 0], sizes = [1, 128], strides = [1, 1]} : vector<3x128xf32> to vector<1x128xf32>
    %31 = vector.broadcast %30 : vector<1x128xf32> to vector<64x128xf32>
    %32 = arith.addf %29, %31 : vector<64x128xf32>
    %c0_11 = arith.constant 0 : index
    %c0_12 = arith.constant 0 : index
    %33 = vector.load %arg4[%c0_11, %c0_12] : memref<64x128xf32, #tpu.memory_space<vmem>>, vector<64x128xf32>
    tpu.vector_store %arg4[%c0_11, %c0_12], %32 {strides = array<i32>} : memref<64x128xf32, #tpu.memory_space<vmem>>, vector<64x128xf32>,
    return
  }
  func.func @transform_0(%arg0: i32) -> (i32, i32) {
    %c0_i32 = arith.constant 0 : i32
    %c0_i32_0 = arith.constant 0 : i32
    return %arg0, %c0_i32 : i32, i32
  }
  func.func @transform_1(%arg0: i32) -> (i32, i32) {
    %c0_i32 = arith.constant 0 : i32
    %c0_i32_0 = arith.constant 0 : i32
    %c0_i32_1 = arith.constant 0 : i32
    return %c0_i32, %c0_i32_0 : i32, i32
  }
  func.func @transform_2(%arg0: i32) -> (i32, i32) {
    %c0_i32 = arith.constant 0 : i32
    %c0_i32_0 = arith.constant 0 : i32
    %c0_i32_1 = arith.constant 0 : i32
    return %c0_i32, %c0_i32_0 : i32, i32
  }
  func.func @transform_3(%arg0: i32) -> (i32, i32) {
    %c0_i32 = arith.constant 0 : i32
    %c0_i32_0 = arith.constant 0 : i32
    return %arg0, %c0_i32 : i32, i32
  }
}

</mosaic_0001>

<llo_original>
// kernel: overlap_patch_embed.1
$region0: #{overlap_patch_embed.1}
  #allocation0 [shape = 'u32[]', space=smem, size = 0x4, offset = 0x4, fixed_abs, tag = 'smem constant byte address 0x4 - core index']
  #allocation1 [shape = 'u32[72,128]{1,0:T(1,128)}', space=vmem, size = 0x9000, scoped, tag = 'internal scratch']
  %s0 = inlined_call_operand.vmem [shape: bf16[128,160], index: 0, kind: input, shape index: {}]
  %s1 = inlined_call_operand.vmem [shape: bf16[160,128], index: 1, kind: input, shape index: {}]
  %s2 = inlined_call_operand.vmem [shape: f32[3,128], index: 2, kind: input, shape index: {}]
  %s3 = inlined_call_operand.hbm [shape: f32[128,128], index: 3, kind: output, shape index: {}]
  %s4 = sld [smem:[#allocation0]]
  $region45: #{overlap_patch_embed.1} parent=0
    _
  %s6 = ssub.s32 1, %s4
  %s7 = scalar_select 0, %s6, %s4
  $region1: #{overlap_patch_embed.1} parent=0
    #allocation2 [shape = 'u8[65536]{0}', space=vmem, size = 0x10000, scoped, tag = 'output window, operand 0']
    #allocation3 [shape = 's32[2]{0}', space=sflag, size = 0x8, scoped, tag = 'scoped memory for overlap_patch_embed.1']
    %8 = vsyncpa [#allocation3], 0
    %s9 = scalar_lea.sflag [#allocation3], 1
    %10 = vsyncpa %s9, 0
    loop: start=0, step=1, limit=4
    $region2: #{overlap_patch_embed.1} parent=1 // loop_pre_header
      _
    $region3: #{overlap_patch_embed.1} parent=1 // loop_header
      %s12 = sphi 0, %s16
      %p13 = scmp.ge.s32.totalorder %s12, 4
      %s22 = sphi 0, %s24
      %s25 = sphi 0, %s22
      %s26 = sphi 0, %s25
      %s42 = sphi 0, %s26
      %s46 = sphi 0, %s46
      %s48 = sphi 0, %s46
      %s49 = sphi 0, %s48
      %s63 = sphi 0, %s49
      %s67 = sphi 0, %s67
      %s69 = sphi 0, %s67
      %s70 = sphi 0, %s69
      %s84 = sphi 0, %s70
      %s90 = sphi 0, %s92
      %s93 = sphi 0, %s90
      %s94 = sphi 0, %s93
      %s110 = sphi 0, %s94
    $region4: #{overlap_patch_embed.1} parent=1 // loop_header_branch
      %15 = sbr.rel (%p13) target = $region8
    $region5: #{overlap_patch_embed.1} parent=1 // loop_body
      %s17 = ssub.s32 %s12, 1
      %s18 = ssub.s32 %s12, 2
      %s19 = sadd.s32 %s12, 1
      %s20 = ssub.s32 %s12, %s19
      %p21 = scmp.eq.s32.totalorder %s20, 0
      %s23 = sadd.s32 %s22, 1
      %s24 = scalar_select %p21, %s22, %s23
      %p27 = pneg %p21
      %p28 = scmp.eq.s32.totalorder %s12, 1
      %p29 = por %p27, %p28
      %p30 = scmp.ne.s32.totalorder %s22, %s25
      %p31 = scmp.eq.s32.totalorder %s12, 0
      %p32 = por %p30, %p31
      %p33 = scmp.ne.s32.totalorder %s22, %s25
      %p34 = scmp.eq.s32.totalorder %s17, 1
      %p35 = por %p33, %p34
      %p36 = scmp.ne.s32.totalorder %s25, %s26
      %p37 = scmp.eq.s32.totalorder %s17, 0
      %p38 = por %p36, %p37
      %p39 = scmp.ne.s32.totalorder %s25, %s26
      %p40 = scmp.eq.s32.totalorder %s18, 1
      %p41 = por %p39, %p40
      %p43 = scmp.ne.s32.totalorder %s26, %s42
      %p44 = scmp.eq.s32.totalorder %s18, 0
      %p45 = por %p43, %p44
      %s47 = sadd.s32 %s46, 1
      %p50 = scmp.eq.s32.totalorder %s12, 1
      %p51 = scmp.ne.s32.totalorder %s46, %s48
      %p52 = scmp.eq.s32.totalorder %s12, 0
      %p53 = por %p51, %p52
      %p54 = scmp.ne.s32.totalorder %s46, %s48
      %p55 = scmp.eq.s32.totalorder %s17, 1
      %p56 = por %p54, %p55
      %p57 = scmp.ne.s32.totalorder %s48, %s49
      %p58 = scmp.eq.s32.totalorder %s17, 0
      %p59 = por %p57, %p58
      %p60 = scmp.ne.s32.totalorder %s48, %s49
      %p61 = scmp.eq.s32.totalorder %s18, 1
      %p62 = por %p60, %p61
      %p64 = scmp.ne.s32.totalorder %s49, %s63
      %p65 = scmp.eq.s32.totalorder %s18, 0
      %p66 = por %p64, %p65
      %s68 = sadd.s32 %s67, 1
      %p71 = scmp.eq.s32.totalorder %s12, 1
      %p72 = scmp.ne.s32.totalorder %s67, %s69
      %p73 = scmp.eq.s32.totalorder %s12, 0
      %p74 = por %p72, %p73
      %p75 = scmp.ne.s32.totalorder %s67, %s69
      %p76 = scmp.eq.s32.totalorder %s17, 1
      %p77 = por %p75, %p76
      %p78 = scmp.ne.s32.totalorder %s69, %s70
      %p79 = scmp.eq.s32.totalorder %s17, 0
      %p80 = por %p78, %p79
      %p81 = scmp.ne.s32.totalorder %s69, %s70
      %p82 = scmp.eq.s32.totalorder %s18, 1
      %p83 = por %p81, %p82
      %p85 = scmp.ne.s32.totalorder %s70, %s84
      %p86 = scmp.eq.s32.totalorder %s18, 0
      %p87 = por %p85, %p86
      %s88 = ssub.s32 %s12, %s19
      %p89 = scmp.eq.s32.totalorder %s88, 0
      %s91 = sadd.s32 %s90, 1
      %s92 = scalar_select %p89, %s90, %s91
      %p95 = pneg %p89
      %p96 = scmp.eq.s32.totalorder %s12, 1
      %p97 = por %p95, %p96
      %p98 = scmp.ne.s32.totalorder %s90, %s93
      %p99 = scmp.eq.s32.totalorder %s12, 0
      %p100 = por %p98, %p99
      %p101 = scmp.ne.s32.totalorder %s90, %s93
      %p102 = scmp.eq.s32.totalorder %s17, 1
      %p103 = por %p101, %p102
      %p104 = scmp.ne.s32.totalorder %s93, %s94
      %p105 = scmp.eq.s32.totalorder %s17, 0
      %p106 = por %p104, %p105
      %p107 = scmp.ne.s32.totalorder %s93, %s94
      %p108 = scmp.eq.s32.totalorder %s18, 1
      %p109 = por %p107, %p108
      %p111 = scmp.ne.s32.totalorder %s94, %s110
      %p112 = scmp.eq.s32.totalorder %s18, 0
      %p113 = por %p111, %p112
      %p114 = scmp.le.s32.totalorder 1, %s12
      %p115 = scmp.lt.s32.totalorder %s12, 3
      %p116 = pnand %p114, %p115
      %p117 = pneg %p116
      // Predicated region
      $region9: #{overlap_patch_embed.1} parent=5 // pred_check
        _
      $region10: #{overlap_patch_embed.1} parent=5 // pred_check_branch
        %119 = sbr.rel (%p116) target = $region12
      $region11: #{overlap_patch_embed.1} parent=5 // pred_region
        %s120 = ssub.s32 %s12, 1
        // Predicated region
        $region13: #{overlap_patch_embed.1} parent=11 // pred_check
          %p121 = pneg %p59
        $region14: #{overlap_patch_embed.1} parent=11 // pred_check_branch
          %123 = sbr.rel (%p121) target = $region16
        $region15: #{overlap_patch_embed.1} parent=11 // pred_region
          _
        $region16: #{overlap_patch_embed.1} parent=11 // pred_fallthru
          _
        // Predicated region
        $region17: #{overlap_patch_embed.1} parent=11 // pred_check
          %p124 = pneg %p80
        $region18: #{overlap_patch_embed.1} parent=11 // pred_check_branch
          %126 = sbr.rel (%p124) target = $region20
        $region19: #{overlap_patch_embed.1} parent=11 // pred_region
          _
        $region20: #{overlap_patch_embed.1} parent=11 // pred_fallthru
          _
      $region12: #{overlap_patch_embed.1} parent=5 // pred_fallthru
        _
      %p127 = scmp.lt.s32.totalorder %s12, 2
      // Predicated region
      $region21: #{overlap_patch_embed.1} parent=5 // pred_check
        %p128 = pneg %p127
      $region22: #{overlap_patch_embed.1} parent=5 // pred_check_branch
        %130 = sbr.rel (%p128) target = $region24
      $region23: #{overlap_patch_embed.1} parent=5 // pred_region
        // Predicated region
        $region25: #{overlap_patch_embed.1} parent=23 // pred_check
          %p131 = pneg %p32
        $region26: #{overlap_patch_embed.1} parent=23 // pred_check_branch
          %133 = sbr.rel (%p131) target = $region28
        $region27: #{overlap_patch_embed.1} parent=23 // pred_region
          %s134 = smul.u32 8, %s12
          %p135 = scmp.lt.s32.totalorder %s134, 15
          %s136 = scalar_select %p135, %s134, 15
          %s137 = smul.addr %s136, 2
          %s138 = smul.addr %s137, 4
          %s139 = scalar_lea.vmem %s0, %s138
          %s140 = smul.u32 8, %s12
        $region28: #{overlap_patch_embed.1} parent=23 // pred_fallthru
          _
      $region24: #{overlap_patch_embed.1} parent=5 // pred_fallthru
        _
      %p141 = scmp.le.s32.totalorder 1, %s12
      %p142 = scmp.lt.s32.totalorder %s12, 3
      %p143 = pnand %p141, %p142
      %p144 = pneg %p143
      // Predicated region
      $region29: #{overlap_patch_embed.1} parent=5 // pred_check
        _
      $region30: #{overlap_patch_embed.1} parent=5 // pred_check_branch
        %146 = sbr.rel (%p143) target = $region32
      $region31: #{overlap_patch_embed.1} parent=5 // pred_region
        %s147 = ssub.s32 %s12, 1
        %s148 = smul.u32 8, %s17
        %p149 = scmp.lt.s32.totalorder %s148, 15
        %s150 = scalar_select %p149, %s148, 15
        %s151 = smul.addr %s150, 2
        %s152 = smul.addr %s151, 4
        %s153 = scalar_lea.vmem %s0, %s152
        %p154 = pneg %p38
        %p155 = pneg %p35
        %p156 = pneg %p59
        %p157 = pneg %p56
        %p158 = pneg %p80
        %p159 = pneg %p77
        %p160 = pneg %p106
        %p161 = pneg %p103
        %s162 = sand.u32 %s93, 1
        %s163 = scalar_lea.sflag [#allocation3], %s162
        %s164 = sand.u32 %s93, 1
        %s165 = smul.addr %s164, 64
        %s166 = scalar_lea.vmem [#allocation2], %s165
        %s167 = smul.u32 8, %s17
        %p168 = scmp.lt.s32.totalorder %s167, 15
        %s169 = scalar_select %p168, %s167, 15
        %s170 = smul.addr %s169, 2
        %s171 = smul.addr %s170, 4
        %s172 = scalar_lea.vmem %s0, %s171
        %s173 = smul.u32 8, %s17
        %s174 = smul.u32 8, %s17
        %v176 = vld [vmem:[%s172] sm:$0xff]
        %v177 = vld [vmem:[%s172 + $0x8] sm:$0xff]
        %v178 = vld [vmem:[%s172 + $0x10] sm:$0xff]
        %v179 = vld [vmem:[%s172 + $0x18] sm:$0xff]
        %v180 = vld [vmem:[%s172 + $0x20] sm:$0xff]
        %v181 = vld [vmem:[%s172 + $0x28] sm:$0xff]
        %v182 = vld [vmem:[%s172 + $0x30] sm:$0xff]
        %v183 = vld [vmem:[%s172 + $0x38] sm:$0xff]
        %v184 = vld [vmem:[%s1] sm:$0xf]
        %v185 = vld [vmem:[%s1 + $0x4] sm:$0xf]
        %v186 = vld [vmem:[%s1 + $0x8] sm:$0xf]
        %v187 = vld [vmem:[%s1 + $0xc] sm:$0xf]
        %v188 = vld [vmem:[%s1 + $0x10] sm:$0xf]
        %v189 = vld [vmem:[%s1 + $0x14] sm:$0xf]
        %v190 = vld [vmem:[%s1 + $0x18] sm:$0xf]
        %v191 = vld [vmem:[%s1 + $0x1c] sm:$0xf]
        %v192 = vld [vmem:[%s1 + $0x20] sm:$0xf]
        %v193 = vld [vmem:[%s1 + $0x24] sm:$0xf]
        %v194 = vld [vmem:[%s1 + $0x28] sm:$0xf]
        %v195 = vld [vmem:[%s1 + $0x2c] sm:$0xf]
        %v196 = vld [vmem:[%s1 + $0x30] sm:$0xf]
        %v197 = vld [vmem:[%s1 + $0x34] sm:$0xf]
        %v198 = vld [vmem:[%s1 + $0x38] sm:$0xf]
        %v199 = vld [vmem:[%s1 + $0x3c] sm:$0xf]
        %v200 = vld [vmem:[%s1 + $0x40] sm:$0xf]
        %v201 = vld [vmem:[%s1 + $0x44] sm:$0xf]
        %v202 = vld [vmem:[%s1 + $0x48] sm:$0xf]
        %v203 = vld [vmem:[%s1 + $0x4c] sm:$0xf]
        %v204 = vld [vmem:[%s2] sm:$0x7]
        %v205 = vperm.slane %v204, 0
        %v214 = vunpack.c.l.b16 %v176
        %v215 = vunpack.c.h.b16 %v176
        %v216 = vunpack.c.l.b16 %v177
        %v217 = vunpack.c.h.b16 %v177
        %v218 = vunpack.c.l.b16 %v178
        %v219 = vunpack.c.h.b16 %v178
        %v220 = vunpack.c.l.b16 %v179
        %v221 = vunpack.c.h.b16 %v179
        %v222 = vunpack.c.l.b16 %v180
        %v223 = vunpack.c.h.b16 %v180
        %v224 = vunpack.c.l.b16 %v181
        %v225 = vunpack.c.h.b16 %v181
        %v226 = vunpack.c.l.b16 %v182
        %v227 = vunpack.c.h.b16 %v182
        %v228 = vunpack.c.l.b16 %v183
        %v229 = vunpack.c.h.b16 %v183
        %v230 = vpack.c.b16 %v216, %v214
        %v231 = vpack.c.b16 %v217, %v215
        %v232 = vpack.c.b16 %v220, %v218
        %v233 = vpack.c.b16 %v221, %v219
        %v234 = vpack.c.b16 %v224, %v222
        %v235 = vpack.c.b16 %v225, %v223
        %v236 = vpack.c.b16 %v228, %v226
        %v237 = vpack.c.b16 %v229, %v227
        %v262 = vunpack.c.l.b16 %v184
        %v263 = vunpack.c.l.b16 %v185
        %v264 = vunpack.c.l.b16 %v186
        %v265 = vunpack.c.l.b16 %v187
        %v266 = vunpack.c.l.b16 %v188
        %v267 = vunpack.c.l.b16 %v189
        %v268 = vunpack.c.l.b16 %v190
        %v269 = vunpack.c.l.b16 %v191
        %v270 = vunpack.c.l.b16 %v192
        %v271 = vunpack.c.l.b16 %v193
        %v272 = vunpack.c.l.b16 %v194
        %v273 = vunpack.c.l.b16 %v195
        %v274 = vunpack.c.l.b16 %v196
        %v275 = vunpack.c.l.b16 %v197
        %v276 = vunpack.c.l.b16 %v198
        %v277 = vunpack.c.l.b16 %v199
        %v278 = vunpack.c.l.b16 %v200
        %v279 = vunpack.c.l.b16 %v201
        %v280 = vunpack.c.l.b16 %v202
        %v281 = vunpack.c.l.b16 %v203
        %v282 = vpack.c.b16 %v263, %v262
        %v283 = vpack.c.b16 %v265, %v264
        %v284 = vpack.c.b16 %v267, %v266
        %v285 = vpack.c.b16 %v269, %v268
        %v286 = vpack.c.b16 %v271, %v270
        %v287 = vpack.c.b16 %v273, %v272
        %v288 = vpack.c.b16 %v275, %v274
        %v289 = vpack.c.b16 %v277, %v276
        %v290 = vpack.c.b16 %v279, %v278
        %v291 = vpack.c.b16 %v281, %v280
        %vm302 = vcmask 261120
        %v304 = vsel %vm302, %v231, 0
        %v307 = vsel %vm302, %v233, 0
        %v310 = vsel %vm302, %v235, 0
        %v313 = vsel %vm302, %v237, 0
        %315 = vmatpush.bf16.msra.mxu0 %v289
        %316 = vmatpush.bf16.msra.mxu0 %v288
        %317 = vmatpush.bf16.msra.mxu0 %v287
        %318 = vmatpush.bf16.msra.mxu0 %v286
        %319 = vmatpush.bf16.msra.mxu0 %v285
        %320 = vmatpush.bf16.msra.mxu0 %v284
        %321 = vmatpush.bf16.msra.mxu0 %v283
        %322 = vmatpush.bf16.msra.mxu0 %v282
        %323 = vmatmul.bf16.gmra.mxu0 %v230
        %v324 = vpop.f32.mrf.mxu0
        %v325 = vadd.f32 %v205, %v324
        %v326 = vpop.f32.mrf.mxu0
        %v327 = vadd.f32 %v205, %v326
        %328 = vmatmul.bf16.gmra.mxu0 %v232
        %v329 = vpop.f32.mrf.mxu0
        %v330 = vadd.f32 %v205, %v329
        %v331 = vpop.f32.mrf.mxu0
        %v332 = vadd.f32 %v205, %v331
        %333 = vmatmul.bf16.gmra.mxu0 %v234
        %v334 = vpop.f32.mrf.mxu0
        %v335 = vadd.f32 %v205, %v334
        %v336 = vpop.f32.mrf.mxu0
        %v337 = vadd.f32 %v205, %v336
        %338 = vmatmul.bf16.gmra.mxu0 %v236
        %v339 = vpop.f32.mrf.mxu0
        %v340 = vadd.f32 %v205, %v339
        %v341 = vpop.f32.mrf.mxu0
        %v342 = vadd.f32 %v205, %v341
        %343 = vdwg.mxu0
        %344 = vmatpush.bf16.msra.mxu0 0
        %345 = vmatpush.bf16.msra.mxu0 0
        %346 = vmatpush.bf16.msra.mxu0 0
        %347 = vmatpush.bf16.msra.mxu0 0
        %348 = vmatpush.bf16.msra.mxu0 0
        %349 = vmatpush.bf16.msra.mxu0 0
        %350 = vmatpush.bf16.msra.mxu0 %v291
        %351 = vmatpush.bf16.msra.mxu0 %v290
        %352 = vmatmul.bf16.gmra.mxu0 %v304
        %v353 = vpop.f32.mrf.mxu0
        %v354 = vadd.f32 %v325, %v353
        %v355 = vpop.f32.mrf.mxu0
        %v356 = vadd.f32 %v327, %v355
        %357 = vmatmul.bf16.gmra.mxu0 %v307
        %v358 = vpop.f32.mrf.mxu0
        %v359 = vadd.f32 %v330, %v358
        %v360 = vpop.f32.mrf.mxu0
        %v361 = vadd.f32 %v332, %v360
        %362 = vmatmul.bf16.gmra.mxu0 %v310
        %v363 = vpop.f32.mrf.mxu0
        %v364 = vadd.f32 %v335, %v363
        %v365 = vpop.f32.mrf.mxu0
        %v366 = vadd.f32 %v337, %v365
        %367 = vmatmul.bf16.gmra.mxu0 %v313
        %v368 = vpop.f32.mrf.mxu0
        %v369 = vadd.f32 %v340, %v368
        %v370 = vpop.f32.mrf.mxu0
        %v371 = vadd.f32 %v342, %v370
        %372 = vdwg.mxu0
        %373 = vadd.xlane.f32.xlu0 %v354
        %v374 = vpop.xlane.xlu0 %373
        %375 = vadd.xlane.f32.xlu0 %v356
        %v376 = vpop.xlane.xlu0 %375
        %377 = vadd.xlane.f32.xlu0 %v359
        %v378 = vpop.xlane.xlu0 %377
        %379 = vadd.xlane.f32.xlu0 %v361
        %v380 = vpop.xlane.xlu0 %379
        %381 = vadd.xlane.f32.xlu0 %v364
        %v382 = vpop.xlane.xlu0 %381
        %383 = vadd.xlane.f32.xlu0 %v366
        %v384 = vpop.xlane.xlu0 %383
        %385 = vadd.xlane.f32.xlu0 %v369
        %v386 = vpop.xlane.xlu0 %385
        %387 = vadd.xlane.f32.xlu0 %v371
        %v388 = vpop.xlane.xlu0 %387
        %v389 = vmul.f32 %v374, 0.015625
        %v390 = vmul.f32 %v376, 0.015625
        %v391 = vmul.f32 %v378, 0.015625
        %v392 = vmul.f32 %v380, 0.015625
        %v393 = vmul.f32 %v382, 0.015625
        %v394 = vmul.f32 %v384, 0.015625
        %v395 = vmul.f32 %v386, 0.015625
        %v396 = vmul.f32 %v388, 0.015625
        %v397 = vmul.f32 %v354, %v354
        %v398 = vmul.f32 %v356, %v356
        %v399 = vmul.f32 %v359, %v359
        %v400 = vmul.f32 %v361, %v361
        %v401 = vmul.f32 %v364, %v364
        %v402 = vmul.f32 %v366, %v366
        %v403 = vmul.f32 %v369, %v369
        %v404 = vmul.f32 %v371, %v371
        %405 = vadd.xlane.f32.xlu0 %v397
        %v406 = vpop.xlane.xlu0 %405
        %407 = vadd.xlane.f32.xlu0 %v398
        %v408 = vpop.xlane.xlu0 %407
        %409 = vadd.xlane.f32.xlu0 %v399
        %v410 = vpop.xlane.xlu0 %409
        %411 = vadd.xlane.f32.xlu0 %v400
        %v412 = vpop.xlane.xlu0 %411
        %413 = vadd.xlane.f32.xlu0 %v401
        %v414 = vpop.xlane.xlu0 %413
        %415 = vadd.xlane.f32.xlu0 %v402
        %v416 = vpop.xlane.xlu0 %415
        %417 = vadd.xlane.f32.xlu0 %v403
        %v418 = vpop.xlane.xlu0 %417
        %419 = vadd.xlane.f32.xlu0 %v404
        %v420 = vpop.xlane.xlu0 %419
        %v421 = vmul.f32 %v406, 0.015625
        %v422 = vmul.f32 %v408, 0.015625
        %v423 = vmul.f32 %v410, 0.015625
        %v424 = vmul.f32 %v412, 0.015625
        %v425 = vmul.f32 %v414, 0.015625
        %v426 = vmul.f32 %v416, 0.015625
        %v427 = vmul.f32 %v418, 0.015625
        %v428 = vmul.f32 %v420, 0.015625
        %v429 = vmul.f32 %v389, %v389
        %v430 = vmul.f32 %v390, %v390
        %v431 = vmul.f32 %v391, %v391
        %v432 = vmul.f32 %v392, %v392
        %v433 = vmul.f32 %v393, %v393
        %v434 = vmul.f32 %v394, %v394
        %v435 = vmul.f32 %v395, %v395
        %v436 = vmul.f32 %v396, %v396
        %v437 = vsub.f32 %v421, %v429
        %v438 = vsub.f32 %v422, %v430
        %v439 = vsub.f32 %v423, %v431
        %v440 = vsub.f32 %v424, %v432
        %v441 = vsub.f32 %v425, %v433
        %v442 = vsub.f32 %v426, %v434
        %v443 = vsub.f32 %v427, %v435
        %v444 = vsub.f32 %v428, %v436
        %v445 = vmax.f32 %v437, 0.0
        %v446 = vmax.f32 %v438, 0.0
        %v447 = vmax.f32 %v439, 0.0
        %v448 = vmax.f32 %v440, 0.0
        %v449 = vmax.f32 %v441, 0.0
        %v450 = vmax.f32 %v442, 0.0
        %v451 = vmax.f32 %v443, 0.0
        %v452 = vmax.f32 %v444, 0.0
        %v453 = vsub.f32 %v354, %v389
        %v454 = vsub.f32 %v356, %v390
        %v455 = vsub.f32 %v359, %v391
        %v456 = vsub.f32 %v361, %v392
        %v457 = vsub.f32 %v364, %v393
        %v458 = vsub.f32 %v366, %v394
        %v459 = vsub.f32 %v369, %v395
        %v460 = vsub.f32 %v371, %v396
        %v461 = vadd.f32 %v445, 1e-05
        %v462 = vadd.f32 %v446, 1e-05
        %v463 = vadd.f32 %v447, 1e-05
        %v464 = vadd.f32 %v448, 1e-05
        %v465 = vadd.f32 %v449, 1e-05
        %v466 = vadd.f32 %v450, 1e-05
        %v467 = vadd.f32 %v451, 1e-05
        %v468 = vadd.f32 %v452, 1e-05
        %v469 = vrsqrt.pop %v461
        %v470 = vmul.f32 %v469, %v461
        %v471 = vmul.f32 %v470, %v469
        %v472 = vmul.f32 0.5, %v471
        %v473 = vsub.f32 1.5, %v472
        %v474 = vmul.f32 %v469, %v473
        %vm475 = vweird.f32 %v461
        %vm476 = vweird.f32 %v469
        %vm477 = vmor %vm475, %vm476
        %v478 = vsel %vm477, %v469, %v474
        %v479 = vrsqrt.pop %v462
        %v480 = vmul.f32 %v479, %v462
        %v481 = vmul.f32 %v480, %v479
        %v482 = vmul.f32 0.5, %v481
        %v483 = vsub.f32 1.5, %v482
        %v484 = vmul.f32 %v479, %v483
        %vm485 = vweird.f32 %v462
        %vm486 = vweird.f32 %v479
        %vm487 = vmor %vm485, %vm486
        %v488 = vsel %vm487, %v479, %v484
        %v489 = vrsqrt.pop %v463
        %v490 = vmul.f32 %v489, %v463
        %v491 = vmul.f32 %v490, %v489
        %v492 = vmul.f32 0.5, %v491
        %v493 = vsub.f32 1.5, %v492
        %v494 = vmul.f32 %v489, %v493
        %vm495 = vweird.f32 %v463
        %vm496 = vweird.f32 %v489
        %vm497 = vmor %vm495, %vm496
        %v498 = vsel %vm497, %v489, %v494
        %v499 = vrsqrt.pop %v464
        %v500 = vmul.f32 %v499, %v464
        %v501 = vmul.f32 %v500, %v499
        %v502 = vmul.f32 0.5, %v501
        %v503 = vsub.f32 1.5, %v502
        %v504 = vmul.f32 %v499, %v503
        %vm505 = vweird.f32 %v464
        %vm506 = vweird.f32 %v499
        %vm507 = vmor %vm505, %vm506
        %v508 = vsel %vm507, %v499, %v504
        %v509 = vrsqrt.pop %v465
        %v510 = vmul.f32 %v509, %v465
        %v511 = vmul.f32 %v510, %v509
        %v512 = vmul.f32 0.5, %v511
        %v513 = vsub.f32 1.5, %v512
        %v514 = vmul.f32 %v509, %v513
        %vm515 = vweird.f32 %v465
        %vm516 = vweird.f32 %v509
        %vm517 = vmor %vm515, %vm516
        %v518 = vsel %vm517, %v509, %v514
        %v519 = vrsqrt.pop %v466
        %v520 = vmul.f32 %v519, %v466
        %v521 = vmul.f32 %v520, %v519
        %v522 = vmul.f32 0.5, %v521
        %v523 = vsub.f32 1.5, %v522
        %v524 = vmul.f32 %v519, %v523
        %vm525 = vweird.f32 %v466
        %vm526 = vweird.f32 %v519
        %vm527 = vmor %vm525, %vm526
        %v528 = vsel %vm527, %v519, %v524
        %v529 = vrsqrt.pop %v467
        %v530 = vmul.f32 %v529, %v467
        %v531 = vmul.f32 %v530, %v529
        %v532 = vmul.f32 0.5, %v531
        %v533 = vsub.f32 1.5, %v532
        %v534 = vmul.f32 %v529, %v533
        %vm535 = vweird.f32 %v467
        %vm536 = vweird.f32 %v529
        %vm537 = vmor %vm535, %vm536
        %v538 = vsel %vm537, %v529, %v534
        %v539 = vrsqrt.pop %v468
        %v540 = vmul.f32 %v539, %v468
        %v541 = vmul.f32 %v540, %v539
        %v542 = vmul.f32 0.5, %v541
        %v543 = vsub.f32 1.5, %v542
        %v544 = vmul.f32 %v539, %v543
        %vm545 = vweird.f32 %v468
        %vm546 = vweird.f32 %v539
        %vm547 = vmor %vm545, %vm546
        %v548 = vsel %vm547, %v539, %v544
        %v549 = vmul.f32 %v453, %v478
        %v550 = vmul.f32 %v454, %v488
        %v551 = vmul.f32 %v455, %v498
        %v552 = vmul.f32 %v456, %v508
        %v553 = vmul.f32 %v457, %v518
        %v554 = vmul.f32 %v458, %v528
        %v555 = vmul.f32 %v459, %v538
        %v556 = vmul.f32 %v460, %v548
        %v557 = vperm.slane %v204, 1
        %v558 = vmul.f32 %v549, %v557
        %v559 = vmul.f32 %v550, %v557
        %v560 = vmul.f32 %v551, %v557
        %v561 = vmul.f32 %v552, %v557
        %v562 = vmul.f32 %v553, %v557
        %v563 = vmul.f32 %v554, %v557
        %v564 = vmul.f32 %v555, %v557
        %v565 = vmul.f32 %v556, %v557
        %v566 = vperm.slane %v204, 2
        %v567 = vadd.f32 %v558, %v566
        %v568 = vadd.f32 %v559, %v566
        %v569 = vadd.f32 %v560, %v566
        %v570 = vadd.f32 %v561, %v566
        %v571 = vadd.f32 %v562, %v566
        %v572 = vadd.f32 %v563, %v566
        %v573 = vadd.f32 %v564, %v566
        %v574 = vadd.f32 %v565, %v566
        %575 = vst [vmem:[%s166] sm:$0xff] %v567
        %576 = vst [vmem:[%s166 + $0x8] sm:$0xff] %v568
        %577 = vst [vmem:[%s166 + $0x10] sm:$0xff] %v569
        %578 = vst [vmem:[%s166 + $0x18] sm:$0xff] %v570
        %579 = vst [vmem:[%s166 + $0x20] sm:$0xff] %v571
        %580 = vst [vmem:[%s166 + $0x28] sm:$0xff] %v572
        %581 = vst [vmem:[%s166 + $0x30] sm:$0xff] %v573
        %582 = vst [vmem:[%s166 + $0x38] sm:$0xff] %v574
        %s583 = sand.u32 %s93, 1
        %s584 = scalar_lea.sflag [#allocation3], %s583
        %s585 = sand.u32 %s93, 1
        %s586 = smul.addr %s585, 64
        %s587 = scalar_lea.vmem [#allocation2], %s586
        // Predicated region
        $region33: #{overlap_patch_embed.1} parent=31 // pred_check
          %p588 = pneg %p103
        $region34: #{overlap_patch_embed.1} parent=31 // pred_check_branch
          %590 = sbr.rel (%p588) target = $region36
        $region35: #{overlap_patch_embed.1} parent=31 // pred_region
          %s591 = smul.u32 8, %s17
          %593 = vsyncadd %s584, 0
          %s594 = smul.addr %s591, 8
          %s595 = scalar_lea.hbm %s3, %s594
          %s596 = sshll.u32 %s587, 4
          %s597 = int_to_ptr.vmem [resolvable:$true] %s596
          %s598 = sshll.u32 %s595, 4
          %s599 = int_to_ptr.hbm [resolvable:$true] %s598
          %604 = dma.vmem_to_hbm [thread:$0]  %s597, 1024, %s599, %s584, 128, 128, 8
        $region36: #{overlap_patch_embed.1} parent=31 // pred_fallthru
          _
      $region32: #{overlap_patch_embed.1} parent=5 // pred_fallthru
        _
      %p605 = scmp.le.s32.totalorder 2, %s12
      // Predicated region
      $region37: #{overlap_patch_embed.1} parent=5 // pred_check
        %p606 = pneg %p605
      $region38: #{overlap_patch_embed.1} parent=5 // pred_check_branch
        %608 = sbr.rel (%p606) target = $region40
      $region39: #{overlap_patch_embed.1} parent=5 // pred_region
        %s609 = ssub.s32 %s12, 2
        // Predicated region
        $region41: #{overlap_patch_embed.1} parent=39 // pred_check
          %p610 = pneg %p109
        $region42: #{overlap_patch_embed.1} parent=39 // pred_check_branch
          %612 = sbr.rel (%p610) target = $region44
        $region43: #{overlap_patch_embed.1} parent=39 // pred_region
          %s613 = sand.u32 %s94, 1
          %s614 = scalar_lea.sflag [#allocation3], %s613
          %s615 = sand.u32 %s94, 1
          %s616 = smul.addr %s615, 64
          %s617 = scalar_lea.vmem [#allocation2], %s616
          %619 = dma.done %s614, 1024
        $region44: #{overlap_patch_embed.1} parent=39 // pred_fallthru
          _
      $region40: #{overlap_patch_embed.1} parent=5 // pred_fallthru
        _
    $region6: #{overlap_patch_embed.1} parent=1 // loop_footer
      %s16 = sadd.s32 1, %s12
    $region7: #{overlap_patch_embed.1} parent=1 // loop_footer_branch
      %11 = sbr.rel target = $region3
    $region8: #{overlap_patch_embed.1} parent=1 // loop_exit
      _
    %620 = vsyncpa [#allocation3], 1
    %s621 = scalar_lea.sflag [#allocation3], 1
    %622 = vsyncpa %s621, 1

</llo_original>
